<compile_context>
chip_gen: v7x
topology: tpu7x:2x2x1
jax: 0.10.0
libtpu: 0.0.40
codegen_flags: <defaults>
</compile_context>

<pallas_src>
import math
import functools

import jax
import jax.numpy as jnp
from jax import lax
from jax.experimental import pallas as pl
from jax.experimental.pallas import tpu as pltpu
import numpy as np

_COL_CHUNK = 512  # output-column tile (lanes); multiple of 256 for v6e/v7x MXU tiles


def _round_up(x, m):
    return (x + m - 1) // m * m


# ----------------------------------------------------------------------------
# Parameter setup (mirrors GaborConv2d.__init__)
# ----------------------------------------------------------------------------
def init_gabor_params(channel_out, init_ratio=1.0):
    if init_ratio <= 0:
        init_ratio = 1.0
    sigma0 = 9.2 * init_ratio
    freq0 = 0.057 / init_ratio
    gamma0 = 2.0
    return dict(
        gamma=jnp.array([gamma0], dtype=jnp.float32),
        sigma=jnp.array([sigma0], dtype=jnp.float32),
        theta=(jnp.arange(channel_out, dtype=jnp.float32) * math.pi / channel_out),
        f=jnp.array([freq0], dtype=jnp.float32),
        psi=jnp.array([0.0], dtype=jnp.float32),
    )


# ----------------------------------------------------------------------------
# Gabor bank generation (mirrors genGaborBank) -- tiny, plain JAX
# ----------------------------------------------------------------------------
def gen_gabor_bank(kernel_size, channel_in, channel_out, sigma, gamma, theta, f, psi):
    xmax = kernel_size // 2
    coords = jnp.arange(-xmax, xmax + 1, dtype=jnp.float32)          # (Keff,)
    Keff = coords.shape[0]
    shape = (channel_out, channel_in, Keff, Keff)
    # y varies along the last dim, x along the second-last (as in the torch code)
    y = jnp.broadcast_to(coords[None, None, None, :], shape)
    x = jnp.broadcast_to(coords[None, None, :, None], shape)

    th = theta.reshape(-1, 1, 1, 1)
    sig = sigma.reshape(-1, 1, 1, 1)
    ff = f.reshape(-1, 1, 1, 1)
    ps = psi.reshape(-1, 1, 1, 1)

    x_theta = x * jnp.cos(th) + y * jnp.sin(th)
    y_theta = -x * jnp.sin(th) + y * jnp.cos(th)

    gb = -jnp.exp(-0.5 * ((gamma * x_theta) ** 2 + y_theta ** 2) / (8.0 * sig ** 2)) \
         * jnp.cos(2.0 * math.pi * ff * x_theta + ps)
    gb = gb - gb.mean(axis=(2, 3), keepdims=True)
    return gb                                                        # (C_out,C_in,K,K)


# ----------------------------------------------------------------------------
# Pallas kernel: one output-column tile per grid step.
#   - gather the K*K taps into a VMEM im2col scratch (K*K*C_in, chunk)
#   - one fused MXU dot: (C_out, K*K*C_in) @ (K*K*C_in, chunk)
# ----------------------------------------------------------------------------
def _make_gabor_kernel(K, C_in, W_pad, chunk, extra):
    def kernel(w_ref, x_ref, o_ref, col_ref):
        # w_ref   : (C_out, K*K*C_in)  bf16, tap-major: col = (ky*K + kx)*C_in + c
        # x_ref   : (C_in, L_pad)      bf16, resident zero-padded flat image (one batch elem)
        # o_ref   : (C_out, chunk)     output column tile (wide columns j = ho*W_pad + wo)
        # col_ref : (K*K*C_in, chunk)  bf16 VMEM scratch, im2col block for this tile
        c0 = pl.multiple_of(pl.program_id(1) * chunk, 128)      # tile base column

        # Build the im2col block: K aligned slab loads (one per ky), then the K
        # kx-taps are static lane-shifted sub-slices of the loaded slab.
        for ky in range(K):
            off = ky * W_pad
            off_al = (off // 128) * 128
            rem = off - off_al                                   # static, < 128
            start = pl.multiple_of(c0 + off_al, 128)             # 128-aligned dyn start
            slab = x_ref[:, pl.ds(start, chunk + extra)]          # (C_in, chunk+extra)
            for kx in range(K):
                t = ky * K + kx
                col_ref[t * C_in:(t + 1) * C_in, :] = slab[:, rem + kx:rem + kx + chunk]

        # Single fused MXU dot over all K*K*C_in taps, f32 accumulation.
        acc = jnp.dot(w_ref[...], col_ref[...], preferred_element_type=jnp.float32)
        o_ref[...] = acc.astype(o_ref.dtype)

    return kernel


@functools.partial(jax.jit,
                   static_argnames=("kernel_size", "stride", "padding", "out_dtype"))
def gabor_conv2d_forward(x, params, *, kernel_size, stride=1, padding=0,
                         out_dtype=jnp.float32):
    """Forward pass of GaborConv2d.  x: (N, C_in, H, W) float32 (NCHW)."""
    N, C_in, H, W = x.shape
    C_out = params["theta"].shape[0]

    # --- Gabor bank (parameter construction, plain JAX) ----------------------
    gb = gen_gabor_bank(kernel_size, C_in, C_out,
                        params["sigma"], params["gamma"], params["theta"],
                        params["f"], params["psi"])           # (C_out,C_in,K,K)
    K = gb.shape[-1]            # effective (odd) kernel size, as in the torch code

    # --- geometry ------------------------------------------------------------
    H_pad, W_pad = H + 2 * padding, W + 2 * padding
    H_full, W_full = H_pad - K + 1, W_pad - K + 1     # dense (stride-1) output
    if H_full <= 0 or W_full <= 0:
        raise ValueError("kernel larger than padded input")

    Jw = H_full * W_pad                               # "wide" output columns
    chunk = min(_COL_CHUNK, _round_up(Jw, 128))       # lane-dense column tile
    Jw_pad = _round_up(Jw, chunk)
    n_chunks = Jw_pad // chunk
    # slab over-read: 128 for the alignment remainder + halo for the kx shifts
    extra = 128 + _round_up(max(K - 1, 1), 128)
    L = H_pad * W_pad
    L_pad = _round_up(max(L, Jw_pad + (K - 1) * W_pad + extra), 128)

    KKC = K * K * C_in

    # --- operand prep (bf16 inputs, f32 accumulation) ------------------------
    xp = jnp.pad(x, ((0, 0), (0, 0), (padding, padding), (padding, padding)))
    x_flat = jnp.pad(xp.reshape(N, C_in, L), ((0, 0), (0, 0), (0, L_pad - L)))
    x_flat = x_flat.astype(jnp.bfloat16)               # (N, C_in, L_pad)
    # Tap-major flatten:  w_r[o, (ky*K + kx)*C_in + c] == gb[o, c, ky, kx]
    w_r = jnp.transpose(gb, (0, 2, 3, 1)).reshape(C_out, KKC)
    w_r = w_r.astype(jnp.bfloat16)                     # (C_out, K*K*C_in)

    kernel = _make_gabor_kernel(K, C_in, W_pad, chunk, extra)

    cost = pl.CostEstimate(
        flops=2 * N * C_out * KKC * Jw_pad,
        transcendentals=0,
        bytes_accessed=(x_flat.size * 2 + w_r.size * 2
                        + N * C_out * Jw_pad * jnp.dtype(out_dtype).itemsize),
    )

    out_wide = pl.pallas_call(
        kernel,
        out_shape=jax.ShapeDtypeStruct((N, C_out, Jw_pad), out_dtype),
        grid_spec=pltpu.PrefetchScalarGridSpec(
            num_scalar_prefetch=0,
            grid=(N, n_chunks),                        # (batch, output-column tiles)
            in_specs=[
                # Gabor bank: same block every step -> fetched once, stays resident.
                pl.BlockSpec((C_out, KKC), lambda n, c: (0, 0)),
                # Whole flat padded image for this batch element; the index_map
                # ignores the chunk axis so the slab stays VMEM-resident across
                # all column tiles of a batch element (1x HBM input traffic).
                pl.BlockSpec((pl.Squeezed(), C_in, L_pad), lambda n, c: (n, 0, 0)),
            ],
            out_specs=pl.BlockSpec((pl.Squeezed(), C_out, chunk),
                                   lambda n, c: (n, 0, c)),
            scratch_shapes=[pltpu.VMEM((KKC, chunk), jnp.bfloat16)],
        ),
        compiler_params=pltpu.CompilerParams(
            # Both axes parallel: batch AND column tiles split across v7x's 2 TCs
            # (neutral on single-TC v5e/v6e).
            dimension_semantics=("parallel", "parallel"),
            vmem_limit_bytes=48 * 1024 * 1024,         # v7x-safe (< 64 MiB physical)
        ),
        cost_estimate=cost,
    )(w_r, x_flat)

    # --- drop the W_pad-W_full garbage columns, apply stride ------------------
    out_full = out_wide[:, :, :Jw].reshape(N, C_out, H_full, W_pad)[:, :, :, :W_full]
    if stride > 1:
        # TODO(synk): stride>1 is realized as dense compute + subsampling (correct
        # but wastes ~stride^2 work); in-kernel strided column mapping not implemented.
        out_full = out_full[:, :, ::stride, ::stride]
    return out_full


# ----------------------------------------------------------------------------
# Reference (pure JAX) for correctness checks
# ----------------------------------------------------------------------------
def gabor_conv2d_reference(x, params, *, kernel_size, stride=1, padding=0,
                           bf16_operands=False):
    C_in = x.shape[1]
    C_out = params["theta"].shape[0]
    gb = gen_gabor_bank(kernel_size, C_in, C_out,
                        params["sigma"], params["gamma"], params["theta"],
                        params["f"], params["psi"])
    if bf16_operands:
        x = x.astype(jnp.bfloat16).astype(jnp.float32)
        gb = gb.astype(jnp.bfloat16).astype(jnp.float32)
    return lax.conv_general_dilated(
        x, gb,
        window_strides=(stride, stride),
        padding=[(padding, padding), (padding, padding)],
        dimension_numbers=("NCHW", "OIHW", "NCHW"),
        precision=lax.Precision.HIGHEST,
    )


if __name__ == "__main__":
    # Small shapes consistent with the module: N=2, C_in=4, H=W=16,
    # C_out=8 orientations, 5x5 Gabor kernel, stride=1, padding=2.
    N, C_in, H, W = 2, 4, 16, 16
    C_out, K, STRIDE, PAD = 8, 5, 1, 2

    key = jax.random.PRNGKey(0)
    x = jax.random.normal(key, (N, C_in, H, W), dtype=jnp.float32)
    params = init_gabor_params(C_out, init_ratio=1.0)

    out = gabor_conv2d_forward(x, params, kernel_size=K, stride=STRIDE, padding=PAD)
    out = jax.block_until_ready(out)
    assert out.shape == (N, C_out, H, W), out.shape

    # (1) Tight check against a conv that uses the same bf16-rounded operands
    #     (isolates kernel correctness from the deliberate bf16 operand cast).
    ref_bf16 = jax.block_until_ready(gabor_conv2d_reference(
        x, params, kernel_size=K, stride=STRIDE, padding=PAD, bf16_operands=True))
    np.testing.assert_allclose(np.asarray(out), np.asarray(ref_bf16),
                               rtol=2e-3, atol=2e-3)

    # (2) Loose check against the full-f32 semantics of the PyTorch module.
    ref_f32 = jax.block_until_ready(gabor_conv2d_reference(
        x, params, kernel_size=K, stride=STRIDE, padding=PAD, bf16_operands=False))
    np.testing.assert_allclose(np.asarray(out), np.asarray(ref_f32),
                               rtol=5e-2, atol=5e-2)

    print("KERNEL_OK")
</pallas_src>

<mosaic_0001>
module attributes {stable_mosaic.version = 11 : i64} {
  func.func @kernel(%arg0: i32, %arg1: i32, %arg2: memref<8x100xbf16, #tpu.memory_space<vmem>>, %arg3: memref<1x4x768xbf16, #tpu.memory_space<vmem>>, %arg4: memref<1x8x384xf32, #tpu.memory_space<vmem>>, %arg5: memref<100x384xbf16, #tpu.memory_space<vmem>>) attributes {dimension_semantics = [#tpu.dimension_semantics<parallel>, #tpu.dimension_semantics<parallel>], iteration_bounds = array<i64: 2, 1>, scalar_prefetch = 0 : i64, scratch_operands = 1 : i64, tpu.core_type = #tpu.core_type<tc>, window_params = [{pipeline_mode = #tpu.pipeline_mode<synchronous>, transform_indices = @transform_0, window_bounds = array<i64: 8, 100>}, {transform_indices = @transform_1, window_bounds = array<i64: 1, 4, 768>}, {transform_indices = @transform_2, window_bounds = array<i64: 1, 8, 384>}]} {
    %c384_i32 = arith.constant 384 : i32
    %0 = arith.muli %arg1, %c384_i32 : i32
    %1 = tpu.assume_multiple %0, 128 : i32
    %c0_i32 = arith.constant 0 : i32
    %2 = arith.addi %1, %c0_i32 : i32
    %3 = tpu.assume_multiple %2, 128 : i32
    %c0 = arith.constant 0 : index
    %c0_0 = arith.constant 0 : index
    %4 = arith.index_cast %3 : i32 to index
    %5 = vector.load %arg3[%c0, %c0_0, %4] : memref<1x4x768xbf16, #tpu.memory_space<vmem>>, vector<1x4x640xbf16>
    %6 = vector.shape_cast %5 : vector<1x4x640xbf16> to vector<4x640xbf16>
    %7 = vector.extract_strided_slice %6 {offsets = [0, 0], sizes = [4, 384], strides = [1, 1]} : vector<4x640xbf16> to vector<4x384xbf16>
    %c0_1 = arith.constant 0 : index
    %c0_2 = arith.constant 0 : index
    %8 = vector.load %arg5[%c0_1, %c0_2] : memref<100x384xbf16, #tpu.memory_space<vmem>>, vector<4x384xbf16>
    tpu.vector_store %arg5[%c0_1, %c0_2], %7 {strides = array<i32>} : memref<100x384xbf16, #tpu.memory_space<vmem>>, vector<4x384xbf16>,
    %9 = vector.extract_strided_slice %6 {offsets = [0, 1], sizes = [4, 384], strides = [1, 1]} : vector<4x640xbf16> to vector<4x384xbf16>
    %c4 = arith.constant 4 : index
    %c0_3 = arith.constant 0 : index
    %10 = vector.load %arg5[%c4, %c0_3] : memref<100x384xbf16, #tpu.memory_space<vmem>>, vector<4x384xbf16>
    tpu.vector_store %arg5[%c4, %c0_3], %9 {strides = array<i32>} : memref<100x384xbf16, #tpu.memory_space<vmem>>, vector<4x384xbf16>,
    %11 = vector.extract_strided_slice %6 {offsets = [0, 2], sizes = [4, 384], strides = [1, 1]} : vector<4x640xbf16> to vector<4x384xbf16>
    %c8 = arith.constant 8 : index
    %c0_4 = arith.constant 0 : index
    %12 = vector.load %arg5[%c8, %c0_4] : memref<100x384xbf16, #tpu.memory_space<vmem>>, vector<4x384xbf16>
    tpu.vector_store %arg5[%c8, %c0_4], %11 {strides = array<i32>} : memref<100x384xbf16, #tpu.memory_space<vmem>>, vector<4x384xbf16>,
    %13 = vector.extract_strided_slice %6 {offsets = [0, 3], sizes = [4, 384], strides = [1, 1]} : vector<4x640xbf16> to vector<4x384xbf16>
    %c12 = arith.constant 12 : index
    %c0_5 = arith.constant 0 : index
    %14 = vector.load %arg5[%c12, %c0_5] : memref<100x384xbf16, #tpu.memory_space<vmem>>, vector<4x384xbf16>
    tpu.vector_store %arg5[%c12, %c0_5], %13 {strides = array<i32>} : memref<100x384xbf16, #tpu.memory_space<vmem>>, vector<4x384xbf16>,
    %15 = vector.extract_strided_slice %6 {offsets = [0, 4], sizes = [4, 384], strides = [1, 1]} : vector<4x640xbf16> to vector<4x384xbf16>
    %c16 = arith.constant 16 : index
    %c0_6 = arith.constant 0 : index
    %16 = vector.load %arg5[%c16, %c0_6] : memref<100x384xbf16, #tpu.memory_space<vmem>>, vector<4x384xbf16>
    tpu.vector_store %arg5[%c16, %c0_6], %15 {strides = array<i32>} : memref<100x384xbf16, #tpu.memory_space<vmem>>, vector<4x384xbf16>,
    %c0_i32_7 = arith.constant 0 : i32
    %17 = arith.addi %1, %c0_i32_7 : i32
    %18 = tpu.assume_multiple %17, 128 : i32
    %c0_8 = arith.constant 0 : index
    %c0_9 = arith.constant 0 : index
    %19 = arith.index_cast %18 : i32 to index
    %20 = vector.load %arg3[%c0_8, %c0_9, %19] : memref<1x4x768xbf16, #tpu.memory_space<vmem>>, vector<1x4x640xbf16>
    %21 = vector.shape_cast %20 : vector<1x4x640xbf16> to vector<4x640xbf16>
    %22 = vector.extract_strided_slice %21 {offsets = [0, 20], sizes = [4, 384], strides = [1, 1]} : vector<4x640xbf16> to vector<4x384xbf16>
    %c20 = arith.constant 20 : index
    %c0_10 = arith.constant 0 : index
    %23 = vector.load %arg5[%c20, %c0_10] : memref<100x384xbf16, #tpu.memory_space<vmem>>, vector<4x384xbf16>
    tpu.vector_store %arg5[%c20, %c0_10], %22 {strides = array<i32>} : memref<100x384xbf16, #tpu.memory_space<vmem>>, vector<4x384xbf16>,
    %24 = vector.extract_strided_slice %21 {offsets = [0, 21], sizes = [4, 384], strides = [1, 1]} : vector<4x640xbf16> to vector<4x384xbf16>
    %c24 = arith.constant 24 : index
    %c0_11 = arith.constant 0 : index
    %25 = vector.load %arg5[%c24, %c0_11] : memref<100x384xbf16, #tpu.memory_space<vmem>>, vector<4x384xbf16>
    tpu.vector_store %arg5[%c24, %c0_11], %24 {strides = array<i32>} : memref<100x384xbf16, #tpu.memory_space<vmem>>, vector<4x384xbf16>,
    %26 = vector.extract_strided_slice %21 {offsets = [0, 22], sizes = [4, 384], strides = [1, 1]} : vector<4x640xbf16> to vector<4x384xbf16>
    %c28 = arith.constant 28 : index
    %c0_12 = arith.constant 0 : index
    %27 = vector.load %arg5[%c28, %c0_12] : memref<100x384xbf16, #tpu.memory_space<vmem>>, vector<4x384xbf16>
    tpu.vector_store %arg5[%c28, %c0_12], %26 {strides = array<i32>} : memref<100x384xbf16, #tpu.memory_space<vmem>>, vector<4x384xbf16>,
    %28 = vector.extract_strided_slice %21 {offsets = [0, 23], sizes = [4, 384], strides = [1, 1]} : vector<4x640xbf16> to vector<4x384xbf16>
    %c32 = arith.constant 32 : index
    %c0_13 = arith.constant 0 : index
    %29 = vector.load %arg5[%c32, %c0_13] : memref<100x384xbf16, #tpu.memory_space<vmem>>, vector<4x384xbf16>
    tpu.vector_store %arg5[%c32, %c0_13], %28 {strides = array<i32>} : memref<100x384xbf16, #tpu.memory_space<vmem>>, vector<4x384xbf16>,
    %30 = vector.extract_strided_slice %21 {offsets = [0, 24], sizes = [4, 384], strides = [1, 1]} : vector<4x640xbf16> to vector<4x384xbf16>
    %c36 = arith.constant 36 : index
    %c0_14 = arith.constant 0 : index
    %31 = vector.load %arg5[%c36, %c0_14] : memref<100x384xbf16, #tpu.memory_space<vmem>>, vector<4x384xbf16>
    tpu.vector_store %arg5[%c36, %c0_14], %30 {strides = array<i32>} : memref<100x384xbf16, #tpu.memory_space<vmem>>, vector<4x384xbf16>,
    %c0_i32_15 = arith.constant 0 : i32
    %32 = arith.addi %1, %c0_i32_15 : i32
    %33 = tpu.assume_multiple %32, 128 : i32
    %c0_16 = arith.constant 0 : index
    %c0_17 = arith.constant 0 : index
    %34 = arith.index_cast %33 : i32 to index
    %35 = vector.load %arg3[%c0_16, %c0_17, %34] : memref<1x4x768xbf16, #tpu.memory_space<vmem>>, vector<1x4x640xbf16>
    %36 = vector.shape_cast %35 : vector<1x4x640xbf16> to vector<4x640xbf16>
    %37 = vector.extract_strided_slice %36 {offsets = [0, 40], sizes = [4, 384], strides = [1, 1]} : vector<4x640xbf16> to vector<4x384xbf16>
    %c40 = arith.constant 40 : index
    %c0_18 = arith.constant 0 : index
    %38 = vector.load %arg5[%c40, %c0_18] : memref<100x384xbf16, #tpu.memory_space<vmem>>, vector<4x384xbf16>
    tpu.vector_store %arg5[%c40, %c0_18], %37 {strides = array<i32>} : memref<100x384xbf16, #tpu.memory_space<vmem>>, vector<4x384xbf16>,
    %39 = vector.extract_strided_slice %36 {offsets = [0, 41], sizes = [4, 384], strides = [1, 1]} : vector<4x640xbf16> to vector<4x384xbf16>
    %c44 = arith.constant 44 : index
    %c0_19 = arith.constant 0 : index
    %40 = vector.load %arg5[%c44, %c0_19] : memref<100x384xbf16, #tpu.memory_space<vmem>>, vector<4x384xbf16>
    tpu.vector_store %arg5[%c44, %c0_19], %39 {strides = array<i32>} : memref<100x384xbf16, #tpu.memory_space<vmem>>, vector<4x384xbf16>,
    %41 = vector.extract_strided_slice %36 {offsets = [0, 42], sizes = [4, 384], strides = [1, 1]} : vector<4x640xbf16> to vector<4x384xbf16>
    %c48 = arith.constant 48 : index
    %c0_20 = arith.constant 0 : index
    %42 = vector.load %arg5[%c48, %c0_20] : memref<100x384xbf16, #tpu.memory_space<vmem>>, vector<4x384xbf16>
    tpu.vector_store %arg5[%c48, %c0_20], %41 {strides = array<i32>} : memref<100x384xbf16, #tpu.memory_space<vmem>>, vector<4x384xbf16>,
    %43 = vector.extract_strided_slice %36 {offsets = [0, 43], sizes = [4, 384], strides = [1, 1]} : vector<4x640xbf16> to vector<4x384xbf16>
    %c52 = arith.constant 52 : index
    %c0_21 = arith.constant 0 : index
    %44 = vector.load %arg5[%c52, %c0_21] : memref<100x384xbf16, #tpu.memory_space<vmem>>, vector<4x384xbf16>
    tpu.vector_store %arg5[%c52, %c0_21], %43 {strides = array<i32>} : memref<100x384xbf16, #tpu.memory_space<vmem>>, vector<4x384xbf16>,
    %45 = vector.extract_strided_slice %36 {offsets = [0, 44], sizes = [4, 384], strides = [1, 1]} : vector<4x640xbf16> to vector<4x384xbf16>
    %c56 = arith.constant 56 : index
    %c0_22 = arith.constant 0 : index
    %46 = vector.load %arg5[%c56, %c0_22] : memref<100x384xbf16, #tpu.memory_space<vmem>>, vector<4x384xbf16>
    tpu.vector_store %arg5[%c56, %c0_22], %45 {strides = array<i32>} : memref<100x384xbf16, #tpu.memory_space<vmem>>, vector<4x384xbf16>,
    %c0_i32_23 = arith.constant 0 : i32
    %47 = arith.addi %1, %c0_i32_23 : i32
    %48 = tpu.assume_multiple %47, 128 : i32
    %c0_24 = arith.constant 0 : index
    %c0_25 = arith.constant 0 : index
    %49 = arith.index_cast %48 : i32 to index
    %50 = vector.load %arg3[%c0_24, %c0_25, %49] : memref<1x4x768xbf16, #tpu.memory_space<vmem>>, vector<1x4x640xbf16>
    %51 = vector.shape_cast %50 : vector<1x4x640xbf16> to vector<4x640xbf16>
    %52 = vector.extract_strided_slice %51 {offsets = [0, 60], sizes = [4, 384], strides = [1, 1]} : vector<4x640xbf16> to vector<4x384xbf16>
    %c60 = arith.constant 60 : index
    %c0_26 = arith.constant 0 : index
    %53 = vector.load %arg5[%c60, %c0_26] : memref<100x384xbf16, #tpu.memory_space<vmem>>, vector<4x384xbf16>
    tpu.vector_store %arg5[%c60, %c0_26], %52 {strides = array<i32>} : memref<100x384xbf16, #tpu.memory_space<vmem>>, vector<4x384xbf16>,
    %54 = vector.extract_strided_slice %51 {offsets = [0, 61], sizes = [4, 384], strides = [1, 1]} : vector<4x640xbf16> to vector<4x384xbf16>
    %c64 = arith.constant 64 : index
    %c0_27 = arith.constant 0 : index
    %55 = vector.load %arg5[%c64, %c0_27] : memref<100x384xbf16, #tpu.memory_space<vmem>>, vector<4x384xbf16>
    tpu.vector_store %arg5[%c64, %c0_27], %54 {strides = array<i32>} : memref<100x384xbf16, #tpu.memory_space<vmem>>, vector<4x384xbf16>,
    %56 = vector.extract_strided_slice %51 {offsets = [0, 62], sizes = [4, 384], strides = [1, 1]} : vector<4x640xbf16> to vector<4x384xbf16>
    %c68 = arith.constant 68 : index
    %c0_28 = arith.constant 0 : index
    %57 = vector.load %arg5[%c68, %c0_28] : memref<100x384xbf16, #tpu.memory_space<vmem>>, vector<4x384xbf16>
    tpu.vector_store %arg5[%c68, %c0_28], %56 {strides = array<i32>} : memref<100x384xbf16, #tpu.memory_space<vmem>>, vector<4x384xbf16>,
    %58 = vector.extract_strided_slice %51 {offsets = [0, 63], sizes = [4, 384], strides = [1, 1]} : vector<4x640xbf16> to vector<4x384xbf16>
    %c72 = arith.constant 72 : index
    %c0_29 = arith.constant 0 : index
    %59 = vector.load %arg5[%c72, %c0_29] : memref<100x384xbf16, #tpu.memory_space<vmem>>, vector<4x384xbf16>
    tpu.vector_store %arg5[%c72, %c0_29], %58 {strides = array<i32>} : memref<100x384xbf16, #tpu.memory_space<vmem>>, vector<4x384xbf16>,
    %60 = vector.extract_strided_slice %51 {offsets = [0, 64], sizes = [4, 384], strides = [1, 1]} : vector<4x640xbf16> to vector<4x384xbf16>
    %c76 = arith.constant 76 : index
    %c0_30 = arith.constant 0 : index
    %61 = vector.load %arg5[%c76, %c0_30] : memref<100x384xbf16, #tpu.memory_space<vmem>>, vector<4x384xbf16>
    tpu.vector_store %arg5[%c76, %c0_30], %60 {strides = array<i32>} : memref<100x384xbf16, #tpu.memory_space<vmem>>, vector<4x384xbf16>,
    %c0_i32_31 = arith.constant 0 : i32
    %62 = arith.addi %1, %c0_i32_31 : i32
    %63 = tpu.assume_multiple %62, 128 : i32
    %c0_32 = arith.constant 0 : index
    %c0_33 = arith.constant 0 : index
    %64 = arith.index_cast %63 : i32 to index
    %65 = vector.load %arg3[%c0_32, %c0_33, %64] : memref<1x4x768xbf16, #tpu.memory_space<vmem>>, vector<1x4x640xbf16>
    %66 = vector.shape_cast %65 : vector<1x4x640xbf16> to vector<4x640xbf16>
    %67 = vector.extract_strided_slice %66 {offsets = [0, 80], sizes = [4, 384], strides = [1, 1]} : vector<4x640xbf16> to vector<4x384xbf16>
    %c80 = arith.constant 80 : index
    %c0_34 = arith.constant 0 : index
    %68 = vector.load %arg5[%c80, %c0_34] : memref<100x384xbf16, #tpu.memory_space<vmem>>, vector<4x384xbf16>
    tpu.vector_store %arg5[%c80, %c0_34], %67 {strides = array<i32>} : memref<100x384xbf16, #tpu.memory_space<vmem>>, vector<4x384xbf16>,
    %69 = vector.extract_strided_slice %66 {offsets = [0, 81], sizes = [4, 384], strides = [1, 1]} : vector<4x640xbf16> to vector<4x384xbf16>
    %c84 = arith.constant 84 : index
    %c0_35 = arith.constant 0 : index
    %70 = vector.load %arg5[%c84, %c0_35] : memref<100x384xbf16, #tpu.memory_space<vmem>>, vector<4x384xbf16>
    tpu.vector_store %arg5[%c84, %c0_35], %69 {strides = array<i32>} : memref<100x384xbf16, #tpu.memory_space<vmem>>, vector<4x384xbf16>,
    %71 = vector.extract_strided_slice %66 {offsets = [0, 82], sizes = [4, 384], strides = [1, 1]} : vector<4x640xbf16> to vector<4x384xbf16>
    %c88 = arith.constant 88 : index
    %c0_36 = arith.constant 0 : index
    %72 = vector.load %arg5[%c88, %c0_36] : memref<100x384xbf16, #tpu.memory_space<vmem>>, vector<4x384xbf16>
    tpu.vector_store %arg5[%c88, %c0_36], %71 {strides = array<i32>} : memref<100x384xbf16, #tpu.memory_space<vmem>>, vector<4x384xbf16>,
    %73 = vector.extract_strided_slice %66 {offsets = [0, 83], sizes = [4, 384], strides = [1, 1]} : vector<4x640xbf16> to vector<4x384xbf16>
    %c92 = arith.constant 92 : index
    %c0_37 = arith.constant 0 : index
    %74 = vector.load %arg5[%c92, %c0_37] : memref<100x384xbf16, #tpu.memory_space<vmem>>, vector<4x384xbf16>
    tpu.vector_store %arg5[%c92, %c0_37], %73 {strides = array<i32>} : memref<100x384xbf16, #tpu.memory_space<vmem>>, vector<4x384xbf16>,
    %75 = vector.extract_strided_slice %66 {offsets = [0, 84], sizes = [4, 384], strides = [1, 1]} : vector<4x640xbf16> to vector<4x384xbf16>
    %c96 = arith.constant 96 : index
    %c0_38 = arith.constant 0 : index
    %76 = vector.load %arg5[%c96, %c0_38] : memref<100x384xbf16, #tpu.memory_space<vmem>>, vector<4x384xbf16>
    tpu.vector_store %arg5[%c96, %c0_38], %75 {strides = array<i32>} : memref<100x384xbf16, #tpu.memory_space<vmem>>, vector<4x384xbf16>,
    %c0_39 = arith.constant 0 : index
    %c0_40 = arith.constant 0 : index
    %77 = vector.load %arg2[%c0_39, %c0_40] : memref<8x100xbf16, #tpu.memory_space<vmem>>, vector<8x100xbf16>
    %c0_41 = arith.constant 0 : index
    %c0_42 = arith.constant 0 : index
    %78 = vector.load %arg5[%c0_41, %c0_42] : memref<100x384xbf16, #tpu.memory_space<vmem>>, vector<100x384xbf16>
    %cst = arith.constant dense<0.000000e+00> : vector<8x384xf32>
    %79 = tpu.matmul %77, %78, %cst {dimension_numbers = #tpu.dot_dimension_numbers<[1], [0], [0], [1], [0, 0, 1, 1], [], []>} : vector<8x100xbf16>, vector<100x384xbf16>, vector<8x384xf32> -> vector<8x384xf32>
    %c0_43 = arith.constant 0 : index
    %c0_44 = arith.constant 0 : index
    %c0_45 = arith.constant 0 : index
    %80 = vector.load %arg4[%c0_43, %c0_44, %c0_45] : memref<1x8x384xf32, #tpu.memory_space<vmem>>, vector<1x8x384xf32>
    %81 = vector.shape_cast %80 : vector<1x8x384xf32> to vector<8x384xf32>
    %82 = vector.shape_cast %79 : vector<8x384xf32> to vector<1x8x384xf32>
    tpu.vector_store %arg4[%c0_43, %c0_44, %c0_45], %82 {strides = array<i32>} : memref<1x8x384xf32, #tpu.memory_space<vmem>>, vector<1x8x384xf32>,
    return
  }
  func.func @transform_0(%arg0: i32, %arg1: i32) -> (i32, i32) {
    %c0_i32 = arith.constant 0 : i32
    %c0_i32_0 = arith.constant 0 : i32
    %c0_i32_1 = arith.constant 0 : i32
    return %c0_i32, %c0_i32_0 : i32, i32
  }
  func.func @transform_1(%arg0: i32, %arg1: i32) -> (i32, i32, i32) {
    %c0_i32 = arith.constant 0 : i32
    %c0_i32_0 = arith.constant 0 : i32
    %c0_i32_1 = arith.constant 0 : i32
    return %arg0, %c0_i32, %c0_i32_0 : i32, i32, i32
  }
  func.func @transform_2(%arg0: i32, %arg1: i32) -> (i32, i32, i32) {
    %c0_i32 = arith.constant 0 : i32
    %c0_i32_0 = arith.constant 0 : i32
    return %arg0, %c0_i32, %arg1 : i32, i32, i32
  }
}

</mosaic_0001>

<llo_original>
// kernel: gabor_conv2d_forward.1
$region0: #{gabor_conv2d_forward.1}
  #allocation0 [shape = 'u32[]', space=smem, size = 0x4, offset = 0x4, fixed_abs, tag = 'smem constant byte address 0x4 - core index']
  #allocation1 [shape = 'u32[144,128]{1,0:T(1,128)}', space=vmem, size = 0x12000, scoped, tag = 'internal scratch']
  #allocation2 [shape = 'bf16[100,384]{1,0:T(8,128)(2,1)}', space=vmem, size = 0x13800, scoped, tag = 'scratch operand']
  %s0 = inlined_call_operand.vmem [shape: bf16[8,100], index: 0, kind: input, shape index: {}]
  %s1 = inlined_call_operand.vmem [shape: bf16[2,4,768], index: 1, kind: input, shape index: {}]
  %s2 = inlined_call_operand.vmem [shape: f32[2,8,384], index: 2, kind: output, shape index: {}]
  %s3 = sld [smem:[#allocation0]]
  $region41: #{gabor_conv2d_forward.1} parent=0
    _
  %s5 = ssub.s32 1, %s3
  %s6 = scalar_select 0, %s5, %s3
  loop: start=0, step=1, limit=4
  $region2: #{gabor_conv2d_forward.1} parent=0 // loop_pre_header
    _
  $region3: #{gabor_conv2d_forward.1} parent=0 // loop_header
    %s8 = sphi 0, %s12
    %p9 = scmp.ge.s32.totalorder %s8, 4
    %s15 = sphi 0, %s27
    %s16 = sphi 0, %s23
    %s17 = sphi 0, %s15
    %s18 = sphi 0, %s16
    %s19 = sphi 0, %s17
    %s20 = sphi 0, %s18
    %s28 = sphi 0, %s28
    %s30 = sphi 0, %s28
    %s31 = sphi 0, %s30
    %s45 = sphi 0, %s31
    %s51 = sphi 0, %s53
    %s54 = sphi 0, %s51
    %s55 = sphi 0, %s54
    %s71 = sphi 0, %s55
    %s79 = sphi 0, %s81
    %s82 = sphi 0, %s79
    %s83 = sphi 0, %s82
    %s99 = sphi 0, %s83
  $region4: #{gabor_conv2d_forward.1} parent=0 // loop_header_branch
    %11 = sbr.rel (%p9) target = $region8
  $region5: #{gabor_conv2d_forward.1} parent=0 // loop_body
    %s13 = ssub.s32 %s8, 1
    %s14 = ssub.s32 %s8, 2
    %s21 = sadd.s32 1, %s16
    %p22 = scmp.ge.s32.totalorder %s21, 1
    %s23 = scalar_select %p22, 0, %s21
    %s24 = sadd.s32 1, %s15
    %s25 = scalar_select %p22, %s24, %s15
    %p26 = scmp.ge.s32.totalorder %s25, 2
    %s27 = scalar_select %p26, 0, %s25
    %s29 = sadd.s32 %s28, 1
    %p32 = scmp.eq.s32.totalorder %s8, 1
    %p33 = scmp.ne.s32.totalorder %s28, %s30
    %p34 = scmp.eq.s32.totalorder %s8, 0
    %p35 = por %p33, %p34
    %p36 = scmp.ne.s32.totalorder %s28, %s30
    %p37 = scmp.eq.s32.totalorder %s13, 1
    %p38 = por %p36, %p37
    %p39 = scmp.ne.s32.totalorder %s30, %s31
    %p40 = scmp.eq.s32.totalorder %s13, 0
    %p41 = por %p39, %p40
    %p42 = scmp.ne.s32.totalorder %s30, %s31
    %p43 = scmp.eq.s32.totalorder %s14, 1
    %p44 = por %p42, %p43
    %p46 = scmp.ne.s32.totalorder %s31, %s45
    %p47 = scmp.eq.s32.totalorder %s14, 0
    %p48 = por %p46, %p47
    %s49 = ssub.s32 %s15, %s27
    %p50 = scmp.eq.s32.totalorder %s49, 0
    %s52 = sadd.s32 %s51, 1
    %s53 = scalar_select %p50, %s51, %s52
    %p56 = pneg %p50
    %p57 = scmp.eq.s32.totalorder %s8, 1
    %p58 = por %p56, %p57
    %p59 = scmp.ne.s32.totalorder %s51, %s54
    %p60 = scmp.eq.s32.totalorder %s8, 0
    %p61 = por %p59, %p60
    %p62 = scmp.ne.s32.totalorder %s51, %s54
    %p63 = scmp.eq.s32.totalorder %s13, 1
    %p64 = por %p62, %p63
    %p65 = scmp.ne.s32.totalorder %s54, %s55
    %p66 = scmp.eq.s32.totalorder %s13, 0
    %p67 = por %p65, %p66
    %p68 = scmp.ne.s32.totalorder %s54, %s55
    %p69 = scmp.eq.s32.totalorder %s14, 1
    %p70 = por %p68, %p69
    %p72 = scmp.ne.s32.totalorder %s55, %s71
    %p73 = scmp.eq.s32.totalorder %s14, 0
    %p74 = por %p72, %p73
    %s75 = ssub.s32 %s15, %s27
    %s76 = ssub.s32 %s16, %s23
    %s77 = sor.u32 %s75, %s76
    %p78 = scmp.eq.s32.totalorder %s77, 0
    %s80 = sadd.s32 %s79, 1
    %s81 = scalar_select %p78, %s79, %s80
    %p84 = pneg %p78
    %p85 = scmp.eq.s32.totalorder %s8, 1
    %p86 = por %p84, %p85
    %p87 = scmp.ne.s32.totalorder %s79, %s82
    %p88 = scmp.eq.s32.totalorder %s8, 0
    %p89 = por %p87, %p88
    %p90 = scmp.ne.s32.totalorder %s79, %s82
    %p91 = scmp.eq.s32.totalorder %s13, 1
    %p92 = por %p90, %p91
    %p93 = scmp.ne.s32.totalorder %s82, %s83
    %p94 = scmp.eq.s32.totalorder %s13, 0
    %p95 = por %p93, %p94
    %p96 = scmp.ne.s32.totalorder %s82, %s83
    %p97 = scmp.eq.s32.totalorder %s14, 1
    %p98 = por %p96, %p97
    %p100 = scmp.ne.s32.totalorder %s83, %s99
    %p101 = scmp.eq.s32.totalorder %s14, 0
    %p102 = por %p100, %p101
    %p103 = scmp.le.s32.totalorder 1, %s8
    %p104 = scmp.lt.s32.totalorder %s8, 3
    %p105 = pnand %p103, %p104
    %p106 = pneg %p105
    // Predicated region
    $region9: #{gabor_conv2d_forward.1} parent=5 // pred_check
      _
    $region10: #{gabor_conv2d_forward.1} parent=5 // pred_check_branch
      %108 = sbr.rel (%p105) target = $region12
    $region11: #{gabor_conv2d_forward.1} parent=5 // pred_region
      %s109 = ssub.s32 %s8, 1
      // Predicated region
      $region13: #{gabor_conv2d_forward.1} parent=11 // pred_check
        %p110 = pneg %p41
      $region14: #{gabor_conv2d_forward.1} parent=11 // pred_check_branch
        %112 = sbr.rel (%p110) target = $region16
      $region15: #{gabor_conv2d_forward.1} parent=11 // pred_region
        _
      $region16: #{gabor_conv2d_forward.1} parent=11 // pred_fallthru
        _
    $region12: #{gabor_conv2d_forward.1} parent=5 // pred_fallthru
      _
    %p113 = scmp.lt.s32.totalorder %s8, 2
    // Predicated region
    $region17: #{gabor_conv2d_forward.1} parent=5 // pred_check
      %p114 = pneg %p113
    $region18: #{gabor_conv2d_forward.1} parent=5 // pred_check_branch
      %116 = sbr.rel (%p114) target = $region20
    $region19: #{gabor_conv2d_forward.1} parent=5 // pred_region
      // Predicated region
      $region21: #{gabor_conv2d_forward.1} parent=19 // pred_check
        %p117 = pneg %p61
      $region22: #{gabor_conv2d_forward.1} parent=19 // pred_check_branch
        %119 = sbr.rel (%p117) target = $region24
      $region23: #{gabor_conv2d_forward.1} parent=19 // pred_region
        %p120 = scmp.lt.s32.totalorder %s15, 1
        %s121 = scalar_select %p120, %s15, 1
        %s122 = smul.addr %s121, 6
        %s123 = smul.addr %s122, 2
        %s124 = scalar_lea.vmem %s1, %s123
      $region24: #{gabor_conv2d_forward.1} parent=19 // pred_fallthru
        _
    $region20: #{gabor_conv2d_forward.1} parent=5 // pred_fallthru
      _
    %p125 = scmp.le.s32.totalorder 1, %s8
    %p126 = scmp.lt.s32.totalorder %s8, 3
    %p127 = pnand %p125, %p126
    %p128 = pneg %p127
    // Predicated region
    $region25: #{gabor_conv2d_forward.1} parent=5 // pred_check
      _
    $region26: #{gabor_conv2d_forward.1} parent=5 // pred_check_branch
      %130 = sbr.rel (%p127) target = $region28
    $region27: #{gabor_conv2d_forward.1} parent=5 // pred_region
      %s131 = ssub.s32 %s8, 1
      %p132 = pneg %p41
      %p133 = pneg %p38
      %p134 = scmp.lt.s32.totalorder %s17, 1
      %s135 = scalar_select %p134, %s17, 1
      %s136 = smul.addr %s135, 6
      %s137 = smul.addr %s136, 2
      %s138 = scalar_lea.vmem %s1, %s137
      %p139 = pneg %p67
      %p140 = pneg %p64
      %p141 = pneg %p95
      %p142 = pneg %p92
      %s143 = smul.u32 3, %s18
      %p144 = scmp.lt.s32.totalorder %s17, 1
      %s145 = scalar_select %p144, %s17, 1
      %p146 = scmp.lt.s32.totalorder %s143, 2
      %s147 = scalar_select %p146, %s143, 2
      %s148 = smul.addr %s145, 3
      %s149 = sadd.s32 %s147, %s148
      %s150 = smul.addr %s149, 8
      %s151 = scalar_lea.vmem %s2, %s150
      %p152 = scmp.lt.s32.totalorder %s17, 1
      %s153 = scalar_select %p152, %s17, 1
      %s154 = smul.addr %s153, 6
      %s155 = smul.addr %s154, 2
      %s156 = scalar_lea.vmem %s1, %s155
      %s157 = smul.u32 3, %s18
      %p158 = scmp.lt.s32.totalorder %s17, 1
      %s159 = scalar_select %p158, %s17, 1
      %p160 = scmp.lt.s32.totalorder %s157, 2
      %s161 = scalar_select %p160, %s157, 2
      %s162 = smul.addr %s159, 3
      %s163 = sadd.s32 %s161, %s162
      %s164 = smul.addr %s163, 8
      %s165 = scalar_lea.vmem %s2, %s164
      %s166 = smul.u32 3, %s18
      %s168 = smul.u32 %s18, 384
      %s169 = sshra.s32 %s168, 7
      %s170 = sand.u32 %s168, 127
      %s171 = smul.addr %s169, 2
      %s172 = scalar_lea.vmem %s156, %s171
      %v173 = vld [vmem:[%s172] sm:$0xff]
      %v175 = vcombine.high %v173, %v173
      %v177 = vunpack.c.l.s4 1983009808
      %v178 = vunpack.c.0.s8 %v177
      %v179 = vlaneseq
      %v180 = vshrl.u32 %v179, 7
      %v181 = vsub.s32 %v178, %v180
      %v182 = vrot.slane %v173, %v181
      %v184 = vunpack.c.l.s4 1983009808
      %v185 = vunpack.c.0.s8 %v184
      %v186 = vlaneseq
      %v187 = vshrl.u32 %v186, 7
      %v188 = vsub.s32 %v185, %v187
      %v189 = vrot.slane %v175, %v188
      %192 = vst [vmem:[#allocation2] sm:$0x33] %v182
      %193 = vst [vmem:[#allocation2 + $0x8] sm:$0x3] %v189
      %v194 = vcombine.low %v173, %v173
      %v196 = vunpack.c.l.s4 1983009808
      %v197 = vunpack.c.0.s8 %v196
      %v198 = vlaneseq
      %v199 = vshrl.u32 %v198, 7
      %v200 = vsub.s32 %v197, %v199
      %v201 = vrot.slane %v194, %v200
      %202 = vrot.lane.b32.xlu0 %v201, 127
      %v203 = vpop.permute.xlu0 %202
      %204 = vrot.lane.b32.xlu0 %v182, 127
      %v205 = vpop.permute.xlu0 %204
      %v206 = vrot.slane %v203, 4
      %v207 = vrot.slane %v205, 4
      %vm208 = vcmask 1043456
      %v209 = vsel %vm208, %v206, %v207
      %vm210 = vcmask 1039360
      %v211 = vsel %vm210, %v203, %v209
      %v212 = vsel %vm210, %v205, %v207
      %215 = vst [vmem:[#allocation2] sm:$0xcc] %v211
      %216 = vst [vmem:[#allocation2 + $0x8] sm:$0xc] %v212
      %217 = vrot.lane.b32.xlu0 %v182, 126
      %v218 = vpop.permute.xlu0 %217
      %219 = vrot.lane.b32.xlu0 %v189, 126
      %v220 = vpop.permute.xlu0 %219
      %v221 = vrot.slane %v218, 4
      %v222 = vrot.slane %v220, 4
      %v223 = vsel %vm208, %v221, %v222
      %vm224 = vcmask 1031168
      %v225 = vsel %vm224, %v218, %v223
      %v226 = vsel %vm224, %v220, %v222
      %229 = vst [vmem:[#allocation2 + $0xc] sm:$0x33] %v225
      %230 = vst [vmem:[#allocation2 + $0x14] sm:$0x3] %v226
      %231 = vrot.lane.b32.xlu0 %v201, 125
      %v232 = vpop.permute.xlu0 %231
      %233 = vrot.lane.b32.xlu0 %v182, 125
      %v234 = vpop.permute.xlu0 %233
      %v235 = vrot.slane %v232, 4
      %v236 = vrot.slane %v234, 4
      %v237 = vsel %vm208, %v235, %v236
      %vm238 = vcmask 1022976
      %v239 = vsel %vm238, %v232, %v237
      %v240 = vsel %vm238, %v234, %v236
      %243 = vst [vmem:[#allocation2 + $0xc] sm:$0xcc] %v239
      %244 = vst [vmem:[#allocation2 + $0x14] sm:$0xc] %v240
      %245 = vrot.lane.b32.xlu0 %v182, 124
      %v246 = vpop.permute.xlu0 %245
      %247 = vrot.lane.b32.xlu0 %v189, 124
      %v248 = vpop.permute.xlu0 %247
      %v249 = vrot.slane %v246, 4
      %v250 = vrot.slane %v248, 4
      %v251 = vsel %vm208, %v249, %v250
      %vm252 = vcmask 1014784
      %v253 = vsel %vm252, %v246, %v251
      %v254 = vsel %vm252, %v248, %v250
      %257 = vst [vmem:[#allocation2 + $0x18] sm:$0x33] %v253
      %258 = vst [vmem:[#allocation2 + $0x20] sm:$0x3] %v254
      %v259 = vld [vmem:[%s172] sm:$0xff]
      %v261 = vcombine.low %v259, %v259
      %v263 = vunpack.c.l.s4 1983009808
      %v264 = vunpack.c.0.s8 %v263
      %v265 = vlaneseq
      %v266 = vshrl.u32 %v265, 7
      %v267 = vsub.s32 %v264, %v266
      %v268 = vrot.slane %v261, %v267
      %v270 = vunpack.c.l.s4 1983009808
      %v271 = vunpack.c.0.s8 %v270
      %v272 = vlaneseq
      %v273 = vshrl.u32 %v272, 7
      %v274 = vsub.s32 %v271, %v273
      %v275 = vrot.slane %v259, %v274
      %276 = vrot.lane.b32.xlu0 %v268, 108
      %v277 = vpop.permute.xlu0 %276
      %278 = vrot.lane.b32.xlu0 %v275, 108
      %v279 = vpop.permute.xlu0 %278
      %v280 = vrot.slane %v277, 4
      %v281 = vrot.slane %v279, 4
      %v282 = vsel %vm208, %v280, %v281
      %vm283 = vcmask 883712
      %v284 = vsel %vm283, %v277, %v282
      %v285 = vsel %vm283, %v279, %v281
      %288 = vst [vmem:[#allocation2 + $0x18] sm:$0xcc] %v284
      %289 = vst [vmem:[#allocation2 + $0x20] sm:$0xc] %v285
      %v290 = vcombine.high %v259, %v259
      %v292 = vunpack.c.l.s4 1983009808
      %v293 = vunpack.c.0.s8 %v292
      %v294 = vlaneseq
      %v295 = vshrl.u32 %v294, 7
      %v296 = vsub.s32 %v293, %v295
      %v297 = vrot.slane %v290, %v296
      %298 = vrot.lane.b32.xlu0 %v275, 107
      %v299 = vpop.permute.xlu0 %298
      %300 = vrot.lane.b32.xlu0 %v297, 107
      %v301 = vpop.permute.xlu0 %300
      %v302 = vrot.slane %v299, 4
      %v303 = vrot.slane %v301, 4
      %v304 = vsel %vm208, %v302, %v303
      %vm305 = vcmask 875520
      %v306 = vsel %vm305, %v299, %v304
      %v307 = vsel %vm305, %v301, %v303
      %310 = vst [vmem:[#allocation2 + $0x24] sm:$0x33] %v306
      %311 = vst [vmem:[#allocation2 + $0x2c] sm:$0x3] %v307
      %312 = vrot.lane.b32.xlu0 %v268, 106
      %v313 = vpop.permute.xlu0 %312
      %314 = vrot.lane.b32.xlu0 %v275, 106
      %v315 = vpop.permute.xlu0 %314
      %v316 = vrot.slane %v313, 4
      %v317 = vrot.slane %v315, 4
      %v318 = vsel %vm208, %v316, %v317
      %vm319 = vcmask 867328
      %v320 = vsel %vm319, %v313, %v318
      %v321 = vsel %vm319, %v315, %v317
      %324 = vst [vmem:[#allocation2 + $0x24] sm:$0xcc] %v320
      %325 = vst [vmem:[#allocation2 + $0x2c] sm:$0xc] %v321
      %326 = vrot.lane.b32.xlu0 %v275, 105
      %v327 = vpop.permute.xlu0 %326
      %328 = vrot.lane.b32.xlu0 %v297, 105
      %v329 = vpop.permute.xlu0 %328
      %v330 = vrot.slane %v327, 4
      %v331 = vrot.slane %v329, 4
      %v332 = vsel %vm208, %v330, %v331
      %vm333 = vcmask 859136
      %v334 = vsel %vm333, %v327, %v332
      %v335 = vsel %vm333, %v329, %v331
      %338 = vst [vmem:[#allocation2 + $0x30] sm:$0x33] %v334
      %339 = vst [vmem:[#allocation2 + $0x38] sm:$0x3] %v335
      %340 = vrot.lane.b32.xlu0 %v268, 104
      %v341 = vpop.permute.xlu0 %340
      %342 = vrot.lane.b32.xlu0 %v275, 104
      %v343 = vpop.permute.xlu0 %342
      %v344 = vrot.slane %v341, 4
      %v345 = vrot.slane %v343, 4
      %v346 = vsel %vm208, %v344, %v345
      %vm347 = vcmask 850944
      %v348 = vsel %vm347, %v341, %v346
      %v349 = vsel %vm347, %v343, %v345
      %352 = vst [vmem:[#allocation2 + $0x30] sm:$0xcc] %v348
      %353 = vst [vmem:[#allocation2 + $0x38] sm:$0xc] %v349
      %v354 = vld [vmem:[%s172] sm:$0xff]
      %v356 = vcombine.high %v354, %v354
      %v358 = vunpack.c.l.s4 1983009808
      %v359 = vunpack.c.0.s8 %v358
      %v360 = vlaneseq
      %v361 = vshrl.u32 %v360, 7
      %v362 = vsub.s32 %v359, %v361
      %v363 = vrot.slane %v354, %v362
      %v365 = vunpack.c.l.s4 1983009808
      %v366 = vunpack.c.0.s8 %v365
      %v367 = vlaneseq
      %v368 = vshrl.u32 %v367, 7
      %v369 = vsub.s32 %v366, %v368
      %v370 = vrot.slane %v356, %v369
      %371 = vrot.lane.b32.xlu0 %v363, 88
      %v372 = vpop.permute.xlu0 %371
      %373 = vrot.lane.b32.xlu0 %v370, 88
      %v374 = vpop.permute.xlu0 %373
      %v375 = vrot.slane %v372, 4
      %v376 = vrot.slane %v374, 4
      %v377 = vsel %vm208, %v375, %v376
      %vm378 = vcmask 719872
      %v379 = vsel %vm378, %v372, %v377
      %v380 = vsel %vm378, %v374, %v376
      %383 = vst [vmem:[#allocation2 + $0x3c] sm:$0x33] %v379
      %384 = vst [vmem:[#allocation2 + $0x44] sm:$0x3] %v380
      %v385 = vcombine.low %v354, %v354
      %v387 = vunpack.c.l.s4 1983009808
      %v388 = vunpack.c.0.s8 %v387
      %v389 = vlaneseq
      %v390 = vshrl.u32 %v389, 7
      %v391 = vsub.s32 %v388, %v390
      %v392 = vrot.slane %v385, %v391
      %393 = vrot.lane.b32.xlu0 %v392, 87
      %v394 = vpop.permute.xlu0 %393
      %395 = vrot.lane.b32.xlu0 %v363, 87
      %v396 = vpop.permute.xlu0 %395
      %v397 = vrot.slane %v394, 4
      %v398 = vrot.slane %v396, 4
      %v399 = vsel %vm208, %v397, %v398
      %vm400 = vcmask 711680
      %v401 = vsel %vm400, %v394, %v399
      %v402 = vsel %vm400, %v396, %v398
      %405 = vst [vmem:[#allocation2 + $0x3c] sm:$0xcc] %v401
      %406 = vst [vmem:[#allocation2 + $0x44] sm:$0xc] %v402
      %407 = vrot.lane.b32.xlu0 %v363, 86
      %v408 = vpop.permute.xlu0 %407
      %409 = vrot.lane.b32.xlu0 %v370, 86
      %v410 = vpop.permute.xlu0 %409
      %v411 = vrot.slane %v408, 4
      %v412 = vrot.slane %v410, 4
      %v413 = vsel %vm208, %v411, %v412
      %vm414 = vcmask 703488
      %v415 = vsel %vm414, %v408, %v413
      %v416 = vsel %vm414, %v410, %v412
      %419 = vst [vmem:[#allocation2 + $0x48] sm:$0x33] %v415
      %420 = vst [vmem:[#allocation2 + $0x50] sm:$0x3] %v416
      %421 = vrot.lane.b32.xlu0 %v392, 85
      %v422 = vpop.permute.xlu0 %421
      %423 = vrot.lane.b32.xlu0 %v363, 85
      %v424 = vpop.permute.xlu0 %423
      %v425 = vrot.slane %v422, 4
      %v426 = vrot.slane %v424, 4
      %v427 = vsel %vm208, %v425, %v426
      %vm428 = vcmask 695296
      %v429 = vsel %vm428, %v422, %v427
      %v430 = vsel %vm428, %v424, %v426
      %433 = vst [vmem:[#allocation2 + $0x48] sm:$0xcc] %v429
      %434 = vst [vmem:[#allocation2 + $0x50] sm:$0xc] %v430
      %435 = vrot.lane.b32.xlu0 %v363, 84
      %v436 = vpop.permute.xlu0 %435
      %437 = vrot.lane.b32.xlu0 %v370, 84
      %v438 = vpop.permute.xlu0 %437
      %v439 = vrot.slane %v436, 4
      %v440 = vrot.slane %v438, 4
      %v441 = vsel %vm208, %v439, %v440
      %vm442 = vcmask 687104
      %v443 = vsel %vm442, %v436, %v441
      %v444 = vsel %vm442, %v438, %v440
      %447 = vst [vmem:[#allocation2 + $0x54] sm:$0x33] %v443
      %448 = vst [vmem:[#allocation2 + $0x5c] sm:$0x3] %v444
      %v449 = vld [vmem:[%s172] sm:$0xff]
      %v451 = vcombine.low %v449, %v449
      %v453 = vunpack.c.l.s4 1983009808
      %v454 = vunpack.c.0.s8 %v453
      %v455 = vlaneseq
      %v456 = vshrl.u32 %v455, 7
      %v457 = vsub.s32 %v454, %v456
      %v458 = vrot.slane %v451, %v457
      %v460 = vunpack.c.l.s4 1983009808
      %v461 = vunpack.c.0.s8 %v460
      %v462 = vlaneseq
      %v463 = vshrl.u32 %v462, 7
      %v464 = vsub.s32 %v461, %v463
      %v465 = vrot.slane %v449, %v464
      %466 = vrot.lane.b32.xlu0 %v458, 68
      %v467 = vpop.permute.xlu0 %466
      %468 = vrot.lane.b32.xlu0 %v465, 68
      %v469 = vpop.permute.xlu0 %468
      %v470 = vrot.slane %v467, 4
      %v471 = vrot.slane %v469, 4
      %v472 = vsel %vm208, %v470, %v471
      %vm473 = vcmask 556032
      %v474 = vsel %vm473, %v467, %v472
      %v475 = vsel %vm473, %v469, %v471
      %478 = vst [vmem:[#allocation2 + $0x54] sm:$0xcc] %v474
      %479 = vst [vmem:[#allocation2 + $0x5c] sm:$0xc] %v475
      %v480 = vcombine.high %v449, %v449
      %v482 = vunpack.c.l.s4 1983009808
      %v483 = vunpack.c.0.s8 %v482
      %v484 = vlaneseq
      %v485 = vshrl.u32 %v484, 7
      %v486 = vsub.s32 %v483, %v485
      %v487 = vrot.slane %v480, %v486
      %488 = vrot.lane.b32.xlu0 %v465, 67
      %v489 = vpop.permute.xlu0 %488
      %490 = vrot.lane.b32.xlu0 %v487, 67
      %v491 = vpop.permute.xlu0 %490
      %v492 = vrot.slane %v489, 4
      %v493 = vrot.slane %v491, 4
      %v494 = vsel %vm208, %v492, %v493
      %vm495 = vcmask 547840
      %v496 = vsel %vm495, %v489, %v494
      %v497 = vsel %vm495, %v491, %v493
      %500 = vst [vmem:[#allocation2 + $0x60] sm:$0x33] %v496
      %501 = vst [vmem:[#allocation2 + $0x68] sm:$0x3] %v497
      %502 = vrot.lane.b32.xlu0 %v458, 66
      %v503 = vpop.permute.xlu0 %502
      %504 = vrot.lane.b32.xlu0 %v465, 66
      %v505 = vpop.permute.xlu0 %504
      %v506 = vrot.slane %v503, 4
      %v507 = vrot.slane %v505, 4
      %v508 = vsel %vm208, %v506, %v507
      %vm509 = vcmask 539648
      %v510 = vsel %vm509, %v503, %v508
      %v511 = vsel %vm509, %v505, %v507
      %514 = vst [vmem:[#allocation2 + $0x60] sm:$0xcc] %v510
      %515 = vst [vmem:[#allocation2 + $0x68] sm:$0xc] %v511
      %516 = vrot.lane.b32.xlu0 %v465, 65
      %v517 = vpop.permute.xlu0 %516
      %518 = vrot.lane.b32.xlu0 %v487, 65
      %v519 = vpop.permute.xlu0 %518
      %v520 = vrot.slane %v517, 4
      %v521 = vrot.slane %v519, 4
      %v522 = vsel %vm208, %v520, %v521
      %vm523 = vcmask 531456
      %v524 = vsel %vm523, %v517, %v522
      %v525 = vsel %vm523, %v519, %v521
      %528 = vst [vmem:[#allocation2 + $0x6c] sm:$0x33] %v524
      %529 = vst [vmem:[#allocation2 + $0x74] sm:$0x3] %v525
      %530 = vrot.lane.b32.xlu0 %v458, 64
      %v531 = vpop.permute.xlu0 %530
      %532 = vrot.lane.b32.xlu0 %v465, 64
      %v533 = vpop.permute.xlu0 %532
      %v534 = vrot.slane %v531, 4
      %v535 = vrot.slane %v533, 4
      %v536 = vsel %vm208, %v534, %v535
      %vm537 = vcmask 523264
      %v538 = vsel %vm537, %v531, %v536
      %v539 = vsel %vm537, %v533, %v535
      %542 = vst [vmem:[#allocation2 + $0x6c] sm:$0xcc] %v538
      %543 = vst [vmem:[#allocation2 + $0x74] sm:$0xc] %v539
      %v544 = vld [vmem:[%s172] sm:$0xff]
      %v546 = vcombine.high %v544, %v544
      %v548 = vunpack.c.l.s4 1983009808
      %v549 = vunpack.c.0.s8 %v548
      %v550 = vlaneseq
      %v551 = vshrl.u32 %v550, 7
      %v552 = vsub.s32 %v549, %v551
      %v553 = vrot.slane %v544, %v552
      %v555 = vunpack.c.l.s4 1983009808
      %v556 = vunpack.c.0.s8 %v555
      %v557 = vlaneseq
      %v558 = vshrl.u32 %v557, 7
      %v559 = vsub.s32 %v556, %v558
      %v560 = vrot.slane %v546, %v559
      %561 = vrot.lane.b32.xlu0 %v553, 48
      %v562 = vpop.permute.xlu0 %561
      %563 = vrot.lane.b32.xlu0 %v560, 48
      %v564 = vpop.permute.xlu0 %563
      %v565 = vrot.slane %v562, 4
      %v566 = vrot.slane %v564, 4
      %v567 = vsel %vm208, %v565, %v566
      %vm568 = vcmask 392192
      %v569 = vsel %vm568, %v562, %v567
      %v570 = vsel %vm568, %v564, %v566
      %573 = vst [vmem:[#allocation2 + $0x78] sm:$0x33] %v569
      %574 = vst [vmem:[#allocation2 + $0x80] sm:$0x3] %v570
      %v575 = vcombine.low %v544, %v544
      %v577 = vunpack.c.l.s4 1983009808
      %v578 = vunpack.c.0.s8 %v577
      %v579 = vlaneseq
      %v580 = vshrl.u32 %v579, 7
      %v581 = vsub.s32 %v578, %v580
      %v582 = vrot.slane %v575, %v581
      %583 = vrot.lane.b32.xlu0 %v582, 47
      %v584 = vpop.permute.xlu0 %583
      %585 = vrot.lane.b32.xlu0 %v553, 47
      %v586 = vpop.permute.xlu0 %585
      %v587 = vrot.slane %v584, 4
      %v588 = vrot.slane %v586, 4
      %v589 = vsel %vm208, %v587, %v588
      %vm590 = vcmask 384000
      %v591 = vsel %vm590, %v584, %v589
      %v592 = vsel %vm590, %v586, %v588
      %595 = vst [vmem:[#allocation2 + $0x78] sm:$0xcc] %v591
      %596 = vst [vmem:[#allocation2 + $0x80] sm:$0xc] %v592
      %597 = vrot.lane.b32.xlu0 %v553, 46
      %v598 = vpop.permute.xlu0 %597
      %599 = vrot.lane.b32.xlu0 %v560, 46
      %v600 = vpop.permute.xlu0 %599
      %v601 = vrot.slane %v598, 4
      %v602 = vrot.slane %v600, 4
      %v603 = vsel %vm208, %v601, %v602
      %vm604 = vcmask 375808
      %v605 = vsel %vm604, %v598, %v603
      %v606 = vsel %vm604, %v600, %v602
      %609 = vst [vmem:[#allocation2 + $0x84] sm:$0x33] %v605
      %610 = vst [vmem:[#allocation2 + $0x8c] sm:$0x3] %v606
      %611 = vrot.lane.b32.xlu0 %v582, 45
      %v612 = vpop.permute.xlu0 %611
      %613 = vrot.lane.b32.xlu0 %v553, 45
      %v614 = vpop.permute.xlu0 %613
      %v615 = vrot.slane %v612, 4
      %v616 = vrot.slane %v614, 4
      %v617 = vsel %vm208, %v615, %v616
      %vm618 = vcmask 367616
      %v619 = vsel %vm618, %v612, %v617
      %v620 = vsel %vm618, %v614, %v616
      %623 = vst [vmem:[#allocation2 + $0x84] sm:$0xcc] %v619
      %624 = vst [vmem:[#allocation2 + $0x8c] sm:$0xc] %v620
      %625 = vrot.lane.b32.xlu0 %v553, 44
      %v626 = vpop.permute.xlu0 %625
      %627 = vrot.lane.b32.xlu0 %v560, 44
      %v628 = vpop.permute.xlu0 %627
      %v629 = vrot.slane %v626, 4
      %v630 = vrot.slane %v628, 4
      %v631 = vsel %vm208, %v629, %v630
      %vm632 = vcmask 359424
      %v633 = vsel %vm632, %v626, %v631
      %v634 = vsel %vm632, %v628, %v630
      %637 = vst [vmem:[#allocation2 + $0x90] sm:$0x33] %v633
      %638 = vst [vmem:[#allocation2 + $0x98] sm:$0x3] %v634
      %v639 = vld [vmem:[%s0] sm:$0xf]
      %v640 = vld [vmem:[#allocation2] sm:$0xff]
      %v641 = vld [vmem:[#allocation2 + $0x8] sm:$0xf]
      %v642 = vld [vmem:[#allocation2 + $0xc] sm:$0xff]
      %v643 = vld [vmem:[#allocation2 + $0x14] sm:$0xf]
      %v644 = vld [vmem:[#allocation2 + $0x18] sm:$0xff]
      %v645 = vld [vmem:[#allocation2 + $0x20] sm:$0xf]
      %v646 = vld [vmem:[#allocation2 + $0x24] sm:$0xff]
      %v647 = vld [vmem:[#allocation2 + $0x2c] sm:$0xf]
      %v648 = vld [vmem:[#allocation2 + $0x30] sm:$0xff]
      %v649 = vld [vmem:[#allocation2 + $0x38] sm:$0xf]
      %v650 = vld [vmem:[#allocation2 + $0x3c] sm:$0xff]
      %v651 = vld [vmem:[#allocation2 + $0x44] sm:$0xf]
      %v652 = vld [vmem:[#allocation2 + $0x48] sm:$0xff]
      %v653 = vld [vmem:[#allocation2 + $0x50] sm:$0xf]
      %v654 = vld [vmem:[#allocation2 + $0x54] sm:$0xff]
      %v655 = vld [vmem:[#allocation2 + $0x5c] sm:$0xf]
      %v656 = vld [vmem:[#allocation2 + $0x60] sm:$0xff]
      %v657 = vld [vmem:[#allocation2 + $0x68] sm:$0xf]
      %v658 = vld [vmem:[#allocation2 + $0x6c] sm:$0xff]
      %v659 = vld [vmem:[#allocation2 + $0x74] sm:$0xf]
      %v660 = vld [vmem:[#allocation2 + $0x78] sm:$0xff]
      %v661 = vld [vmem:[#allocation2 + $0x80] sm:$0xf]
      %v662 = vld [vmem:[#allocation2 + $0x84] sm:$0xff]
      %v663 = vld [vmem:[#allocation2 + $0x8c] sm:$0xf]
      %v664 = vld [vmem:[#allocation2 + $0x90] sm:$0x33]
      %v665 = vld [vmem:[#allocation2 + $0x98] sm:$0x3]
      %v692 = vunpack.c.l.b16 %v640
      %v693 = vunpack.c.h.b16 %v640
      %v694 = vunpack.c.l.b16 %v641
      %v695 = vunpack.c.l.b16 %v642
      %v696 = vunpack.c.h.b16 %v642
      %v697 = vunpack.c.l.b16 %v643
      %v698 = vunpack.c.l.b16 %v644
      %v699 = vunpack.c.h.b16 %v644
      %v700 = vunpack.c.l.b16 %v645
      %v701 = vunpack.c.l.b16 %v646
      %v702 = vunpack.c.h.b16 %v646
      %v703 = vunpack.c.l.b16 %v647
      %v704 = vunpack.c.l.b16 %v648
      %v705 = vunpack.c.h.b16 %v648
      %v706 = vunpack.c.l.b16 %v649
      %v707 = vunpack.c.l.b16 %v650
      %v708 = vunpack.c.h.b16 %v650
      %v709 = vunpack.c.l.b16 %v651
      %v710 = vunpack.c.l.b16 %v652
      %v711 = vunpack.c.h.b16 %v652
      %v712 = vunpack.c.l.b16 %v653
      %v713 = vunpack.c.l.b16 %v654
      %v714 = vunpack.c.h.b16 %v654
      %v715 = vunpack.c.l.b16 %v655
      %v716 = vunpack.c.l.b16 %v656
      %v717 = vunpack.c.h.b16 %v656
      %v718 = vunpack.c.l.b16 %v657
      %v719 = vunpack.c.l.b16 %v658
      %v720 = vunpack.c.h.b16 %v658
      %v721 = vunpack.c.l.b16 %v659
      %v722 = vunpack.c.l.b16 %v660
      %v723 = vunpack.c.h.b16 %v660
      %v724 = vunpack.c.l.b16 %v661
      %v725 = vunpack.c.l.b16 %v662
      %v726 = vunpack.c.h.b16 %v662
      %v727 = vunpack.c.l.b16 %v663
      %v728 = vunpack.c.l.b16 %v664
      %v729 = vunpack.c.h.b16 %v664
      %v730 = vunpack.c.l.b16 %v665
      %v731 = vpack.c.b16 %v695, %v692
      %v732 = vpack.c.b16 %v696, %v693
      %v733 = vpack.c.b16 %v697, %v694
      %v734 = vpack.c.b16 %v701, %v698
      %v735 = vpack.c.b16 %v702, %v699
      %v736 = vpack.c.b16 %v703, %v700
      %v737 = vpack.c.b16 %v707, %v704
      %v738 = vpack.c.b16 %v708, %v705
      %v739 = vpack.c.b16 %v709, %v706
      %v740 = vpack.c.b16 %v713, %v710
      %v741 = vpack.c.b16 %v714, %v711
      %v742 = vpack.c.b16 %v715, %v712
      %v743 = vpack.c.b16 %v719, %v716
      %v744 = vpack.c.b16 %v720, %v717
      %v745 = vpack.c.b16 %v721, %v718
      %v746 = vpack.c.b16 %v725, %v722
      %v747 = vpack.c.b16 %v726, %v723
      %v748 = vpack.c.b16 %v727, %v724
      %v749 = vpack.c.b16 %v728, %v728
      %v750 = vpack.c.b16 %v729, %v729
      %v751 = vpack.c.b16 %v730, %v730
      %vm770 = vcmask 818176
      %v772 = vsel %vm770, %v639, 0
      %vm774 = vcmask 1041408
      %v776 = vsel %vm774, %v749, 0
      %v779 = vsel %vm774, %v750, 0
      %v782 = vsel %vm774, %v751, 0
      %784 = vmatprep.subr.bf16.mxu0 %v732
      %785 = vmatpush1.bf16.msra.mxu0 %v731
      %786 = vmatprep.subr.bf16.mxu0 %v735
      %787 = vmatpush1.bf16.msra.mxu0 %v734
      %788 = vmatprep.subr.bf16.mxu0 %v738
      %789 = vmatpush1.bf16.msra.mxu0 %v737
      %790 = vmatprep.subr.bf16.mxu0 %v741
      %791 = vmatpush1.bf16.msra.mxu0 %v740
      %792 = vmatprep.subr.bf16.mxu0 %v744
      %793 = vmatpush1.bf16.msra.mxu0 %v743
      %794 = vmatprep.subr.bf16.mxu0 %v747
      %795 = vmatpush1.bf16.msra.mxu0 %v746
      %796 = vmatprep.subr.bf16.mxu0 %v779
      %797 = vmatpush1.bf16.msra.mxu0 %v776
      %798 = vmatprep.subr.bf16.mxu0 0
      %799 = vmatpush1.bf16.msra.mxu0 0
      %800 = vmatprep.subr.bf16.mxu0 0
      %801 = vmatpush1.bf16.msra.mxu0 0
      %802 = vmatprep.subr.bf16.mxu0 0
      %803 = vmatpush1.bf16.msra.mxu0 0
      %804 = vmatprep.subr.bf16.mxu0 0
      %805 = vmatpush1.bf16.msra.mxu0 0
      %806 = vmatprep.subr.bf16.mxu0 0
      %807 = vmatpush1.bf16.msra.mxu0 0
      %808 = vmatprep.subr.bf16.mxu0 0
      %809 = vmatpush1.bf16.msra.mxu0 0
      %810 = vmatprep.subr.bf16.mxu0 0
      %811 = vmatpush1.bf16.msra.mxu0 0
      %812 = vmatprep.subr.bf16.mxu0 0
      %813 = vmatpush1.bf16.msra.mxu0 0
      %814 = vmatprep.subr.bf16.mxu0 0
      %815 = vmatpush1.bf16.msra.mxu0 0
      %816 = vmatprep.mubr.bf16.mxu0 0
      %817 = vmatmul.mubr.bf16.gmra.mrb[0].mxu0 %v772
      %v818 = vpop.f32.mrb[0].mxu0
      %v819 = vadd.f32 0.0, %v818
      %v820 = vpop.f32.mrb[0].mxu0
      %v821 = vadd.f32 0.0, %v820
      %v822 = vpop.f32.mrb[0].mxu0
      %v823 = vpop.f32.mrb[0].mxu0
      %824 = vdwg.mxu0
      %825 = vmatprep.subr.bf16.mxu0 0
      %826 = vmatpush1.bf16.msra.mxu0 %v733
      %827 = vmatprep.subr.bf16.mxu0 0
      %828 = vmatpush1.bf16.msra.mxu0 %v736
      %829 = vmatprep.subr.bf16.mxu0 0
      %830 = vmatpush1.bf16.msra.mxu0 %v739
      %831 = vmatprep.subr.bf16.mxu0 0
      %832 = vmatpush1.bf16.msra.mxu0 %v742
      %833 = vmatprep.subr.bf16.mxu0 0
      %834 = vmatpush1.bf16.msra.mxu0 %v745
      %835 = vmatprep.subr.bf16.mxu0 0
      %836 = vmatpush1.bf16.msra.mxu0 %v748
      %837 = vmatprep.subr.bf16.mxu0 0
      %838 = vmatpush1.bf16.msra.mxu0 %v782
      %839 = vmatprep.subr.bf16.mxu0 0
      %840 = vmatpush1.bf16.msra.mxu0 0
      %841 = vmatprep.subr.bf16.mxu0 0
      %842 = vmatpush1.bf16.msra.mxu0 0
      %843 = vmatprep.subr.bf16.mxu0 0
      %844 = vmatpush1.bf16.msra.mxu0 0
      %845 = vmatprep.subr.bf16.mxu0 0
      %846 = vmatpush1.bf16.msra.mxu0 0
      %847 = vmatprep.subr.bf16.mxu0 0
      %848 = vmatpush1.bf16.msra.mxu0 0
      %849 = vmatprep.subr.bf16.mxu0 0
      %850 = vmatpush1.bf16.msra.mxu0 0
      %851 = vmatprep.subr.bf16.mxu0 0
      %852 = vmatpush1.bf16.msra.mxu0 0
      %853 = vmatprep.subr.bf16.mxu0 0
      %854 = vmatpush1.bf16.msra.mxu0 0
      %855 = vmatprep.subr.bf16.mxu0 0
      %856 = vmatpush1.bf16.msra.mxu0 0
      %857 = vmatprep.mubr.bf16.mxu0 0
      %858 = vmatmul.mubr.bf16.gmra.mrb[0].mxu0 %v772
      %v859 = vpop.f32.mrb[0].mxu0
      %v860 = vadd.f32 0.0, %v859
      %v861 = vpop.f32.mrb[0].mxu0
      %v862 = vpop.f32.mrb[0].mxu0
      %v863 = vpop.f32.mrb[0].mxu0
      %864 = vdwg.mxu0
      %865 = vst [vmem:[%s165] sm:$0xff] %v819
      %866 = vst [vmem:[%s165 + $0x8] sm:$0xff] %v821
      %867 = vst [vmem:[%s165 + $0x10] sm:$0xff] %v860
      %s868 = smul.u32 3, %s18
      %p869 = scmp.lt.s32.totalorder %s17, 1
      %s870 = scalar_select %p869, %s17, 1
      %p871 = scmp.lt.s32.totalorder %s868, 2
      %s872 = scalar_select %p871, %s868, 2
      %s873 = smul.addr %s870, 3
      %s874 = sadd.s32 %s872, %s873
      %s875 = smul.addr %s874, 8
      %s876 = scalar_lea.vmem %s2, %s875
      // Predicated region
      $region29: #{gabor_conv2d_forward.1} parent=27 // pred_check
        %p877 = pneg %p92
      $region30: #{gabor_conv2d_forward.1} parent=27 // pred_check_branch
        %879 = sbr.rel (%p877) target = $region32
      $region31: #{gabor_conv2d_forward.1} parent=27 // pred_region
        %s880 = smul.u32 3, %s18
      $region32: #{gabor_conv2d_forward.1} parent=27 // pred_fallthru
        _
    $region28: #{gabor_conv2d_forward.1} parent=5 // pred_fallthru
      _
    %p881 = scmp.le.s32.totalorder 2, %s8
    // Predicated region
    $region33: #{gabor_conv2d_forward.1} parent=5 // pred_check
      %p882 = pneg %p881
    $region34: #{gabor_conv2d_forward.1} parent=5 // pred_check_branch
      %884 = sbr.rel (%p882) target = $region36
    $region35: #{gabor_conv2d_forward.1} parent=5 // pred_region
      %s885 = ssub.s32 %s8, 2
      // Predicated region
      $region37: #{gabor_conv2d_forward.1} parent=35 // pred_check
        %p886 = pneg %p98
      $region38: #{gabor_conv2d_forward.1} parent=35 // pred_check_branch
        %888 = sbr.rel (%p886) target = $region40
      $region39: #{gabor_conv2d_forward.1} parent=35 // pred_region
        %s889 = smul.u32 3, %s20
        %p890 = scmp.lt.s32.totalorder %s19, 1
        %s891 = scalar_select %p890, %s19, 1
        %p892 = scmp.lt.s32.totalorder %s889, 2
        %s893 = scalar_select %p892, %s889, 2
        %s894 = smul.addr %s891, 3
        %s895 = sadd.s32 %s893, %s894
        %s896 = smul.addr %s895, 8
        %s897 = scalar_lea.vmem %s2, %s896
      $region40: #{gabor_conv2d_forward.1} parent=35 // pred_fallthru
        _
    $region36: #{gabor_conv2d_forward.1} parent=5 // pred_fallthru
      _
  $region6: #{gabor_conv2d_forward.1} parent=0 // loop_footer
    %s12 = sadd.s32 1, %s8
  $region7: #{gabor_conv2d_forward.1} parent=0 // loop_footer_branch
    %7 = sbr.rel target = $region3
  $region8: #{gabor_conv2d_forward.1} parent=0 // loop_exit
    _

</llo_original>
